<compile_context>
chip_gen: v5e
topology: v5e:2x2
jax: 0.10.0
libtpu: 0.0.40
codegen_flags: <defaults>
</compile_context>

<pallas_src>
import jax
import jax.numpy as jnp
from jax.experimental import pallas as pl
from jax.experimental.pallas import tpu as pltpu


def _round_up(x, m):
    return (x + m - 1) // m * m


def _slab_layout(vocab_size, hidden_dim):
    """Row offsets of each section inside the packed f32 weight slab.

    All offsets are multiples of 8 so every in-kernel slice is (8,128)-tile aligned.
    Layout (lane width = 4*hidden_dim):
      [0            : V        )  emb_proj  = embedding @ W_ih + (b_ih + b_hh)
      [whh_off      : +H       )  W_hh      (right-multiply form, gate order i,f,g,o)
      [wtag_off     : +H       )  W_tag     ([H, T] in lanes 0..T-1, rest zero)
      [btag_off     : +1       )  b_tag     (lanes 0..T-1, rest zero)
    """
    emb_off = 0
    whh_off = _round_up(vocab_size, 8)
    wtag_off = whh_off + hidden_dim
    btag_off = wtag_off + hidden_dim
    n_rows = _round_up(btag_off + 1, 8)
    return emb_off, whh_off, wtag_off, btag_off, n_rows


def _make_kernel(seq_len, hidden_dim, tagset_size, whh_off, wtag_off, btag_off):
    H, T = hidden_dim, tagset_size
    G = 4 * H

    def kernel(q_ref, slab_ref, out_ref):
        # ---- static, tile-aligned views of the packed slab (loaded once) ----
        w_hh = slab_ref[pl.ds(whh_off, H), :]          # [H, 4H] f32
        w_tag = slab_ref[pl.ds(wtag_off, H), :]        # [H, 4H] f32 (lanes >= T are 0)
        b_tag = slab_ref[pl.ds(btag_off, 1), :]        # [1, 4H] f32 (lanes >= T are 0)

        # ---- fused embedding gather of the pre-projected rows --------------
        # emb_proj[v] = embedding[v] @ W_ih + (b_ih + b_hh) was computed host
        # side in f32; each gathered row is lane-dense [1, 4H] and independent
        # of h/c, so these loads overlap the recurrence.
        gx = [slab_ref[pl.ds(q_ref[t], 1), :] for t in range(seq_len)]

        h = jnp.zeros((1, H), jnp.float32)
        c = jnp.zeros((1, H), jnp.float32)
        h_sum = jnp.zeros((1, H), jnp.float32)

        # ---- fully unrolled recurrence --------------------------------------
        # Serial chain per step: h @ W_hh (MXU), one fused tanh push (EUP),
        # the c/h elementwise update (VPU) and tanh(c) (EUP).
        for t in range(seq_len):
            gates = gx[t] + jnp.dot(h, w_hh,
                                    preferred_element_type=jnp.float32)   # [1, 4H]
            # One EUP push for sigmoid(i,f,o) AND tanh(g):
            #   row 0: tanh(0.5*gates) -> sigmoid via 0.5*t+0.5
            #   row 1: tanh(gates)     -> g gate slice
            tt = jnp.tanh(jnp.concatenate([0.5 * gates, gates], axis=0))  # [2, 4H]
            sg = 0.5 * tt[0:1, :] + 0.5
            i_g = sg[:, 0 * H:1 * H]
            f_g = sg[:, 1 * H:2 * H]
            o_g = sg[:, 3 * H:4 * H]
            g_g = tt[1:2, 2 * H:3 * H]
            c = f_g * c + i_g * g_g
            h = o_g * jnp.tanh(c)
            h_sum = h_sum + h

        # torch.mm(forAverage, lstm_out): mean hidden state over time -> [1, H]
        h_avg = h_sum * (1.0 / seq_len)

        # hidden2tag linear; padded lanes of w_tag/b_tag are zero, slice first T.
        tag_full = jnp.dot(h_avg, w_tag,
                           preferred_element_type=jnp.float32) + b_tag    # [1, 4H]
        tag_space = tag_full[:, 0:T]                                      # [1, T]

        # F.log_softmax over the tag dimension (numerically stable)
        m = jnp.max(tag_space, axis=-1, keepdims=True)
        shifted = tag_space - m
        lse = jnp.log(jnp.sum(jnp.exp(shifted), axis=-1, keepdims=True))
        out_ref[...] = shifted - lse

    return kernel


def init_params(key, vocab_size, embedding_dim, hidden_dim, tagset_size):
    """torch-equivalent random init, all f32. Gate order (i, f, g, o), weights
    stored transposed for right-multiplication."""
    ks = jax.random.split(key, 7)
    bound = 1.0 / (hidden_dim ** 0.5)

    def u(k, shape):
        return jax.random.uniform(k, shape, jnp.float32, -bound, bound)

    return {
        "embedding": jax.random.normal(ks[0], (vocab_size, embedding_dim),
                                       jnp.float32),
        "w_ih": u(ks[1], (embedding_dim, 4 * hidden_dim)),
        "w_hh": u(ks[2], (hidden_dim, 4 * hidden_dim)),
        "b_lstm": u(ks[3], (1, 4 * hidden_dim)) + u(ks[4], (1, 4 * hidden_dim)),
        "w_tag": u(ks[5], (hidden_dim, tagset_size)),
        "b_tag": u(ks[6], (1, tagset_size)),
    }


def pack_params(params, vocab_size, hidden_dim, tagset_size):
    """Host-side: fold embedding through W_ih and pack everything into one
    tile-aligned f32 [n_rows, 4H] slab (single VMEM DMA at call time)."""
    H, T, V = hidden_dim, tagset_size, vocab_size
    G = 4 * H
    emb_off, whh_off, wtag_off, btag_off, n_rows = _slab_layout(V, H)

    emb_proj = (jnp.dot(params["embedding"], params["w_ih"])
                + params["b_lstm"]).astype(jnp.float32)        # [V, 4H]

    slab = jnp.zeros((n_rows, G), jnp.float32)
    slab = slab.at[emb_off:emb_off + V, :].set(emb_proj)
    slab = slab.at[whh_off:whh_off + H, :].set(params["w_hh"])
    slab = slab.at[wtag_off:wtag_off + H, 0:T].set(params["w_tag"])
    slab = slab.at[btag_off, 0:T].set(params["b_tag"][0])
    return slab


def make_lstm_math_forward(seq_len, vocab_size, hidden_dim, tagset_size):
    assert hidden_dim % 8 == 0, "hidden_dim must be a multiple of 8"
    assert tagset_size <= 4 * hidden_dim
    H, T, G = hidden_dim, tagset_size, 4 * hidden_dim
    _, whh_off, wtag_off, btag_off, n_rows = _slab_layout(vocab_size, hidden_dim)

    kernel = _make_kernel(seq_len, H, T, whh_off, wtag_off, btag_off)

    vmem = pl.BlockSpec(memory_space=pltpu.MemorySpace.VMEM)
    call = pl.pallas_call(
        kernel,
        out_shape=jax.ShapeDtypeStruct((1, T), jnp.float32),
        grid_spec=pltpu.PrefetchScalarGridSpec(
            num_scalar_prefetch=1,          # question ids -> SMEM
            grid=(1,),
            in_specs=[vmem],                # single packed weight slab
            out_specs=vmem,
        ),
        cost_estimate=pl.CostEstimate(
            flops=(seq_len + 1) * 2 * H * G,
            transcendentals=seq_len * (2 * G + H) + T,
            bytes_accessed=n_rows * G * 4 + seq_len * 4 + T * 4,
        ),
    )

    @jax.jit
    def forward(question, slab):
        # nn.Embedding would raise on an out-of-range id; Pallas vector loads
        # are not bounds-checked, so clamp host-side.
        q = jnp.clip(question.astype(jnp.int32), 0, vocab_size - 1)
        return call(q, slab)

    return forward


def reference_forward(question, params):
    """Pure-JAX reference of the torch forward (fresh zero hidden state)."""
    H = params["w_hh"].shape[0]
    embeds = params["embedding"][question]                       # [seq, E]
    gates_x = embeds @ params["w_ih"] + params["b_lstm"]         # [seq, 4H]

    def step(carry, gx):
        h, c = carry
        gates = gx[None, :] + h @ params["w_hh"]
        i = jax.nn.sigmoid(gates[:, 0:H])
        f = jax.nn.sigmoid(gates[:, H:2 * H])
        g = jnp.tanh(gates[:, 2 * H:3 * H])
        o = jax.nn.sigmoid(gates[:, 3 * H:4 * H])
        c = f * c + i * g
        h = o * jnp.tanh(c)
        return (h, c), h[0]

    init = (jnp.zeros((1, H), jnp.float32), jnp.zeros((1, H), jnp.float32))
    _, hs = jax.lax.scan(step, init, gates_x)                    # [seq, H]
    h_avg = jnp.mean(hs, axis=0, keepdims=True)                  # [1, H]
    tag_space = h_avg @ params["w_tag"] + params["b_tag"]        # [1, T]
    return jax.nn.log_softmax(tag_space, axis=-1)


if __name__ == "__main__":
    EMBEDDING_DIM = 16
    HIDDEN_DIM = 32
    VOCAB_SIZE = 50
    TAGSET_SIZE = 8
    SEQ_LEN = 8

    key = jax.random.PRNGKey(0)
    pkey, qkey = jax.random.split(key)
    params = init_params(pkey, VOCAB_SIZE, EMBEDDING_DIM, HIDDEN_DIM,
                         TAGSET_SIZE)
    slab = pack_params(params, VOCAB_SIZE, HIDDEN_DIM, TAGSET_SIZE)
    question = jax.random.randint(qkey, (SEQ_LEN,), 0, VOCAB_SIZE, jnp.int32)

    forward = make_lstm_math_forward(SEQ_LEN, VOCAB_SIZE, HIDDEN_DIM,
                                     TAGSET_SIZE)
    tag_scores = forward(question, slab)
    jax.block_until_ready(tag_scores)

    assert tag_scores.shape == (1, TAGSET_SIZE)
    # log_softmax sanity: probabilities sum to 1
    assert jnp.allclose(jnp.sum(jnp.exp(tag_scores)), 1.0, atol=1e-4)
    # agreement with the pure-JAX reference (loose tol: MXU default f32 precision)
    ref = reference_forward(question, params)
    assert jnp.allclose(tag_scores, ref, atol=2e-2, rtol=2e-2), (tag_scores, ref)
    print("KERNEL_OK")
</pallas_src>

<mosaic_0001>
module attributes {stable_mosaic.version = 11 : i64} {
  func.func @kernel(%arg0: i32, %arg1: memref<8xi32, #tpu.memory_space<smem>>, %arg2: memref<128x128xf32, #tpu.memory_space<vmem>>, %arg3: memref<1x8xf32, #tpu.memory_space<vmem>>) attributes {dimension_semantics = [#tpu.dimension_semantics<arbitrary>], iteration_bounds = array<i64: 1>, scalar_prefetch = 1 : i64, scratch_operands = 0 : i64, tpu.core_type = #tpu.core_type<tc>, window_params = [{pipeline_mode = #tpu.pipeline_mode<synchronous>, transform_indices = @transform_0, window_bounds = array<i64: 128, 128>}, {pipeline_mode = #tpu.pipeline_mode<synchronous>, transform_indices = @transform_1, window_bounds = array<i64: 1, 8>}]} {
    %c56 = arith.constant 56 : index
    %c0 = arith.constant 0 : index
    %0 = vector.load %arg2[%c56, %c0] : memref<128x128xf32, #tpu.memory_space<vmem>>, vector<32x128xf32>
    %c88 = arith.constant 88 : index
    %c0_0 = arith.constant 0 : index
    %1 = vector.load %arg2[%c88, %c0_0] : memref<128x128xf32, #tpu.memory_space<vmem>>, vector<32x128xf32>
    %c120 = arith.constant 120 : index
    %c0_1 = arith.constant 0 : index
    %2 = vector.load %arg2[%c120, %c0_1] : memref<128x128xf32, #tpu.memory_space<vmem>>, vector<1x128xf32>
    %c0_2 = arith.constant 0 : index
    %3 = memref.load %arg1[%c0_2] : memref<8xi32, #tpu.memory_space<smem>>
    %4 = arith.index_cast %3 : i32 to index
    %c0_3 = arith.constant 0 : index
    %5 = vector.load %arg2[%4, %c0_3] : memref<128x128xf32, #tpu.memory_space<vmem>>, vector<1x128xf32>
    %c1 = arith.constant 1 : index
    %6 = memref.load %arg1[%c1] : memref<8xi32, #tpu.memory_space<smem>>
    %7 = arith.index_cast %6 : i32 to index
    %c0_4 = arith.constant 0 : index
    %8 = vector.load %arg2[%7, %c0_4] : memref<128x128xf32, #tpu.memory_space<vmem>>, vector<1x128xf32>
    %c2 = arith.constant 2 : index
    %9 = memref.load %arg1[%c2] : memref<8xi32, #tpu.memory_space<smem>>
    %10 = arith.index_cast %9 : i32 to index
    %c0_5 = arith.constant 0 : index
    %11 = vector.load %arg2[%10, %c0_5] : memref<128x128xf32, #tpu.memory_space<vmem>>, vector<1x128xf32>
    %c3 = arith.constant 3 : index
    %12 = memref.load %arg1[%c3] : memref<8xi32, #tpu.memory_space<smem>>
    %13 = arith.index_cast %12 : i32 to index
    %c0_6 = arith.constant 0 : index
    %14 = vector.load %arg2[%13, %c0_6] : memref<128x128xf32, #tpu.memory_space<vmem>>, vector<1x128xf32>
    %c4 = arith.constant 4 : index
    %15 = memref.load %arg1[%c4] : memref<8xi32, #tpu.memory_space<smem>>
    %16 = arith.index_cast %15 : i32 to index
    %c0_7 = arith.constant 0 : index
    %17 = vector.load %arg2[%16, %c0_7] : memref<128x128xf32, #tpu.memory_space<vmem>>, vector<1x128xf32>
    %c5 = arith.constant 5 : index
    %18 = memref.load %arg1[%c5] : memref<8xi32, #tpu.memory_space<smem>>
    %19 = arith.index_cast %18 : i32 to index
    %c0_8 = arith.constant 0 : index
    %20 = vector.load %arg2[%19, %c0_8] : memref<128x128xf32, #tpu.memory_space<vmem>>, vector<1x128xf32>
    %c6 = arith.constant 6 : index
    %21 = memref.load %arg1[%c6] : memref<8xi32, #tpu.memory_space<smem>>
    %22 = arith.index_cast %21 : i32 to index
    %c0_9 = arith.constant 0 : index
    %23 = vector.load %arg2[%22, %c0_9] : memref<128x128xf32, #tpu.memory_space<vmem>>, vector<1x128xf32>
    %c7 = arith.constant 7 : index
    %24 = memref.load %arg1[%c7] : memref<8xi32, #tpu.memory_space<smem>>
    %25 = arith.index_cast %24 : i32 to index
    %c0_10 = arith.constant 0 : index
    %26 = vector.load %arg2[%25, %c0_10] : memref<128x128xf32, #tpu.memory_space<vmem>>, vector<1x128xf32>
    %cst = arith.constant 0.000000e+00 : f32
    %27 = vector.broadcast %cst : f32 to vector<1x32xf32>
    %cst_11 = arith.constant 0.000000e+00 : f32
    %28 = vector.broadcast %cst_11 : f32 to vector<1x32xf32>
    %cst_12 = arith.constant 0.000000e+00 : f32
    %29 = vector.broadcast %cst_12 : f32 to vector<1x32xf32>
    %cst_13 = arith.constant dense<0.000000e+00> : vector<1x128xf32>
    %30 = tpu.matmul %27, %0, %cst_13 {dimension_numbers = #tpu.dot_dimension_numbers<[1], [0], [0], [1], [0, 0, 1, 1], [], []>} : vector<1x32xf32>, vector<32x128xf32>, vector<1x128xf32> -> vector<1x128xf32>
    %31 = arith.addf %5, %30 : vector<1x128xf32>
    %cst_14 = arith.constant 5.000000e-01 : f32
    %32 = vector.broadcast %cst_14 : f32 to vector<1x128xf32>
    %33 = arith.mulf %32, %31 : vector<1x128xf32>
    %34 = tpu.concatenate %33, %31 in 0 : vector<1x128xf32>, vector<1x128xf32> -> vector<2x128xf32>
    %35 = math.tanh %34 : vector<2x128xf32>
    %36 = vector.extract_strided_slice %35 {offsets = [0, 0], sizes = [1, 128], strides = [1, 1]} : vector<2x128xf32> to vector<1x128xf32>
    %cst_15 = arith.constant 5.000000e-01 : f32
    %37 = vector.broadcast %cst_15 : f32 to vector<1x128xf32>
    %38 = arith.mulf %37, %36 : vector<1x128xf32>
    %cst_16 = arith.constant 5.000000e-01 : f32
    %39 = vector.broadcast %cst_16 : f32 to vector<1x128xf32>
    %40 = arith.addf %38, %39 : vector<1x128xf32>
    %41 = vector.extract_strided_slice %40 {offsets = [0, 0], sizes = [1, 32], strides = [1, 1]} : vector<1x128xf32> to vector<1x32xf32>
    %42 = vector.extract_strided_slice %40 {offsets = [0, 32], sizes = [1, 32], strides = [1, 1]} : vector<1x128xf32> to vector<1x32xf32>
    %43 = vector.extract_strided_slice %40 {offsets = [0, 96], sizes = [1, 32], strides = [1, 1]} : vector<1x128xf32> to vector<1x32xf32>
    %44 = vector.extract_strided_slice %35 {offsets = [1, 64], sizes = [1, 32], strides = [1, 1]} : vector<2x128xf32> to vector<1x32xf32>
    %45 = arith.mulf %42, %28 : vector<1x32xf32>
    %46 = arith.mulf %41, %44 : vector<1x32xf32>
    %47 = arith.addf %45, %46 : vector<1x32xf32>
    %48 = math.tanh %47 : vector<1x32xf32>
    %49 = arith.mulf %43, %48 : vector<1x32xf32>
    %50 = arith.addf %29, %49 : vector<1x32xf32>
    %cst_17 = arith.constant dense<0.000000e+00> : vector<1x128xf32>
    %51 = tpu.matmul %49, %0, %cst_17 {dimension_numbers = #tpu.dot_dimension_numbers<[1], [0], [0], [1], [0, 0, 1, 1], [], []>} : vector<1x32xf32>, vector<32x128xf32>, vector<1x128xf32> -> vector<1x128xf32>
    %52 = arith.addf %8, %51 : vector<1x128xf32>
    %cst_18 = arith.constant 5.000000e-01 : f32
    %53 = vector.broadcast %cst_18 : f32 to vector<1x128xf32>
    %54 = arith.mulf %53, %52 : vector<1x128xf32>
    %55 = tpu.concatenate %54, %52 in 0 : vector<1x128xf32>, vector<1x128xf32> -> vector<2x128xf32>
    %56 = math.tanh %55 : vector<2x128xf32>
    %57 = vector.extract_strided_slice %56 {offsets = [0, 0], sizes = [1, 128], strides = [1, 1]} : vector<2x128xf32> to vector<1x128xf32>
    %cst_19 = arith.constant 5.000000e-01 : f32
    %58 = vector.broadcast %cst_19 : f32 to vector<1x128xf32>
    %59 = arith.mulf %58, %57 : vector<1x128xf32>
    %cst_20 = arith.constant 5.000000e-01 : f32
    %60 = vector.broadcast %cst_20 : f32 to vector<1x128xf32>
    %61 = arith.addf %59, %60 : vector<1x128xf32>
    %62 = vector.extract_strided_slice %61 {offsets = [0, 0], sizes = [1, 32], strides = [1, 1]} : vector<1x128xf32> to vector<1x32xf32>
    %63 = vector.extract_strided_slice %61 {offsets = [0, 32], sizes = [1, 32], strides = [1, 1]} : vector<1x128xf32> to vector<1x32xf32>
    %64 = vector.extract_strided_slice %61 {offsets = [0, 96], sizes = [1, 32], strides = [1, 1]} : vector<1x128xf32> to vector<1x32xf32>
    %65 = vector.extract_strided_slice %56 {offsets = [1, 64], sizes = [1, 32], strides = [1, 1]} : vector<2x128xf32> to vector<1x32xf32>
    %66 = arith.mulf %63, %47 : vector<1x32xf32>
    %67 = arith.mulf %62, %65 : vector<1x32xf32>
    %68 = arith.addf %66, %67 : vector<1x32xf32>
    %69 = math.tanh %68 : vector<1x32xf32>
    %70 = arith.mulf %64, %69 : vector<1x32xf32>
    %71 = arith.addf %50, %70 : vector<1x32xf32>
    %cst_21 = arith.constant dense<0.000000e+00> : vector<1x128xf32>
    %72 = tpu.matmul %70, %0, %cst_21 {dimension_numbers = #tpu.dot_dimension_numbers<[1], [0], [0], [1], [0, 0, 1, 1], [], []>} : vector<1x32xf32>, vector<32x128xf32>, vector<1x128xf32> -> vector<1x128xf32>
    %73 = arith.addf %11, %72 : vector<1x128xf32>
    %cst_22 = arith.constant 5.000000e-01 : f32
    %74 = vector.broadcast %cst_22 : f32 to vector<1x128xf32>
    %75 = arith.mulf %74, %73 : vector<1x128xf32>
    %76 = tpu.concatenate %75, %73 in 0 : vector<1x128xf32>, vector<1x128xf32> -> vector<2x128xf32>
    %77 = math.tanh %76 : vector<2x128xf32>
    %78 = vector.extract_strided_slice %77 {offsets = [0, 0], sizes = [1, 128], strides = [1, 1]} : vector<2x128xf32> to vector<1x128xf32>
    %cst_23 = arith.constant 5.000000e-01 : f32
    %79 = vector.broadcast %cst_23 : f32 to vector<1x128xf32>
    %80 = arith.mulf %79, %78 : vector<1x128xf32>
    %cst_24 = arith.constant 5.000000e-01 : f32
    %81 = vector.broadcast %cst_24 : f32 to vector<1x128xf32>
    %82 = arith.addf %80, %81 : vector<1x128xf32>
    %83 = vector.extract_strided_slice %82 {offsets = [0, 0], sizes = [1, 32], strides = [1, 1]} : vector<1x128xf32> to vector<1x32xf32>
    %84 = vector.extract_strided_slice %82 {offsets = [0, 32], sizes = [1, 32], strides = [1, 1]} : vector<1x128xf32> to vector<1x32xf32>
    %85 = vector.extract_strided_slice %82 {offsets = [0, 96], sizes = [1, 32], strides = [1, 1]} : vector<1x128xf32> to vector<1x32xf32>
    %86 = vector.extract_strided_slice %77 {offsets = [1, 64], sizes = [1, 32], strides = [1, 1]} : vector<2x128xf32> to vector<1x32xf32>
    %87 = arith.mulf %84, %68 : vector<1x32xf32>
    %88 = arith.mulf %83, %86 : vector<1x32xf32>
    %89 = arith.addf %87, %88 : vector<1x32xf32>
    %90 = math.tanh %89 : vector<1x32xf32>
    %91 = arith.mulf %85, %90 : vector<1x32xf32>
    %92 = arith.addf %71, %91 : vector<1x32xf32>
    %cst_25 = arith.constant dense<0.000000e+00> : vector<1x128xf32>
    %93 = tpu.matmul %91, %0, %cst_25 {dimension_numbers = #tpu.dot_dimension_numbers<[1], [0], [0], [1], [0, 0, 1, 1], [], []>} : vector<1x32xf32>, vector<32x128xf32>, vector<1x128xf32> -> vector<1x128xf32>
    %94 = arith.addf %14, %93 : vector<1x128xf32>
    %cst_26 = arith.constant 5.000000e-01 : f32
    %95 = vector.broadcast %cst_26 : f32 to vector<1x128xf32>
    %96 = arith.mulf %95, %94 : vector<1x128xf32>
    %97 = tpu.concatenate %96, %94 in 0 : vector<1x128xf32>, vector<1x128xf32> -> vector<2x128xf32>
    %98 = math.tanh %97 : vector<2x128xf32>
    %99 = vector.extract_strided_slice %98 {offsets = [0, 0], sizes = [1, 128], strides = [1, 1]} : vector<2x128xf32> to vector<1x128xf32>
    %cst_27 = arith.constant 5.000000e-01 : f32
    %100 = vector.broadcast %cst_27 : f32 to vector<1x128xf32>
    %101 = arith.mulf %100, %99 : vector<1x128xf32>
    %cst_28 = arith.constant 5.000000e-01 : f32
    %102 = vector.broadcast %cst_28 : f32 to vector<1x128xf32>
    %103 = arith.addf %101, %102 : vector<1x128xf32>
    %104 = vector.extract_strided_slice %103 {offsets = [0, 0], sizes = [1, 32], strides = [1, 1]} : vector<1x128xf32> to vector<1x32xf32>
    %105 = vector.extract_strided_slice %103 {offsets = [0, 32], sizes = [1, 32], strides = [1, 1]} : vector<1x128xf32> to vector<1x32xf32>
    %106 = vector.extract_strided_slice %103 {offsets = [0, 96], sizes = [1, 32], strides = [1, 1]} : vector<1x128xf32> to vector<1x32xf32>
    %107 = vector.extract_strided_slice %98 {offsets = [1, 64], sizes = [1, 32], strides = [1, 1]} : vector<2x128xf32> to vector<1x32xf32>
    %108 = arith.mulf %105, %89 : vector<1x32xf32>
    %109 = arith.mulf %104, %107 : vector<1x32xf32>
    %110 = arith.addf %108, %109 : vector<1x32xf32>
    %111 = math.tanh %110 : vector<1x32xf32>
    %112 = arith.mulf %106, %111 : vector<1x32xf32>
    %113 = arith.addf %92, %112 : vector<1x32xf32>
    %cst_29 = arith.constant dense<0.000000e+00> : vector<1x128xf32>
    %114 = tpu.matmul %112, %0, %cst_29 {dimension_numbers = #tpu.dot_dimension_numbers<[1], [0], [0], [1], [0, 0, 1, 1], [], []>} : vector<1x32xf32>, vector<32x128xf32>, vector<1x128xf32> -> vector<1x128xf32>
    %115 = arith.addf %17, %114 : vector<1x128xf32>
    %cst_30 = arith.constant 5.000000e-01 : f32
    %116 = vector.broadcast %cst_30 : f32 to vector<1x128xf32>
    %117 = arith.mulf %116, %115 : vector<1x128xf32>
    %118 = tpu.concatenate %117, %115 in 0 : vector<1x128xf32>, vector<1x128xf32> -> vector<2x128xf32>
    %119 = math.tanh %118 : vector<2x128xf32>
    %120 = vector.extract_strided_slice %119 {offsets = [0, 0], sizes = [1, 128], strides = [1, 1]} : vector<2x128xf32> to vector<1x128xf32>
    %cst_31 = arith.constant 5.000000e-01 : f32
    %121 = vector.broadcast %cst_31 : f32 to vector<1x128xf32>
    %122 = arith.mulf %121, %120 : vector<1x128xf32>
    %cst_32 = arith.constant 5.000000e-01 : f32
    %123 = vector.broadcast %cst_32 : f32 to vector<1x128xf32>
    %124 = arith.addf %122, %123 : vector<1x128xf32>
    %125 = vector.extract_strided_slice %124 {offsets = [0, 0], sizes = [1, 32], strides = [1, 1]} : vector<1x128xf32> to vector<1x32xf32>
    %126 = vector.extract_strided_slice %124 {offsets = [0, 32], sizes = [1, 32], strides = [1, 1]} : vector<1x128xf32> to vector<1x32xf32>
    %127 = vector.extract_strided_slice %124 {offsets = [0, 96], sizes = [1, 32], strides = [1, 1]} : vector<1x128xf32> to vector<1x32xf32>
    %128 = vector.extract_strided_slice %119 {offsets = [1, 64], sizes = [1, 32], strides = [1, 1]} : vector<2x128xf32> to vector<1x32xf32>
    %129 = arith.mulf %126, %110 : vector<1x32xf32>
    %130 = arith.mulf %125, %128 : vector<1x32xf32>
    %131 = arith.addf %129, %130 : vector<1x32xf32>
    %132 = math.tanh %131 : vector<1x32xf32>
    %133 = arith.mulf %127, %132 : vector<1x32xf32>
    %134 = arith.addf %113, %133 : vector<1x32xf32>
    %cst_33 = arith.constant dense<0.000000e+00> : vector<1x128xf32>
    %135 = tpu.matmul %133, %0, %cst_33 {dimension_numbers = #tpu.dot_dimension_numbers<[1], [0], [0], [1], [0, 0, 1, 1], [], []>} : vector<1x32xf32>, vector<32x128xf32>, vector<1x128xf32> -> vector<1x128xf32>
    %136 = arith.addf %20, %135 : vector<1x128xf32>
    %cst_34 = arith.constant 5.000000e-01 : f32
    %137 = vector.broadcast %cst_34 : f32 to vector<1x128xf32>
    %138 = arith.mulf %137, %136 : vector<1x128xf32>
    %139 = tpu.concatenate %138, %136 in 0 : vector<1x128xf32>, vector<1x128xf32> -> vector<2x128xf32>
    %140 = math.tanh %139 : vector<2x128xf32>
    %141 = vector.extract_strided_slice %140 {offsets = [0, 0], sizes = [1, 128], strides = [1, 1]} : vector<2x128xf32> to vector<1x128xf32>
    %cst_35 = arith.constant 5.000000e-01 : f32
    %142 = vector.broadcast %cst_35 : f32 to vector<1x128xf32>
    %143 = arith.mulf %142, %141 : vector<1x128xf32>
    %cst_36 = arith.constant 5.000000e-01 : f32
    %144 = vector.broadcast %cst_36 : f32 to vector<1x128xf32>
    %145 = arith.addf %143, %144 : vector<1x128xf32>
    %146 = vector.extract_strided_slice %145 {offsets = [0, 0], sizes = [1, 32], strides = [1, 1]} : vector<1x128xf32> to vector<1x32xf32>
    %147 = vector.extract_strided_slice %145 {offsets = [0, 32], sizes = [1, 32], strides = [1, 1]} : vector<1x128xf32> to vector<1x32xf32>
    %148 = vector.extract_strided_slice %145 {offsets = [0, 96], sizes = [1, 32], strides = [1, 1]} : vector<1x128xf32> to vector<1x32xf32>
    %149 = vector.extract_strided_slice %140 {offsets = [1, 64], sizes = [1, 32], strides = [1, 1]} : vector<2x128xf32> to vector<1x32xf32>
    %150 = arith.mulf %147, %131 : vector<1x32xf32>
    %151 = arith.mulf %146, %149 : vector<1x32xf32>
    %152 = arith.addf %150, %151 : vector<1x32xf32>
    %153 = math.tanh %152 : vector<1x32xf32>
    %154 = arith.mulf %148, %153 : vector<1x32xf32>
    %155 = arith.addf %134, %154 : vector<1x32xf32>
    %cst_37 = arith.constant dense<0.000000e+00> : vector<1x128xf32>
    %156 = tpu.matmul %154, %0, %cst_37 {dimension_numbers = #tpu.dot_dimension_numbers<[1], [0], [0], [1], [0, 0, 1, 1], [], []>} : vector<1x32xf32>, vector<32x128xf32>, vector<1x128xf32> -> vector<1x128xf32>
    %157 = arith.addf %23, %156 : vector<1x128xf32>
    %cst_38 = arith.constant 5.000000e-01 : f32
    %158 = vector.broadcast %cst_38 : f32 to vector<1x128xf32>
    %159 = arith.mulf %158, %157 : vector<1x128xf32>
    %160 = tpu.concatenate %159, %157 in 0 : vector<1x128xf32>, vector<1x128xf32> -> vector<2x128xf32>
    %161 = math.tanh %160 : vector<2x128xf32>
    %162 = vector.extract_strided_slice %161 {offsets = [0, 0], sizes = [1, 128], strides = [1, 1]} : vector<2x128xf32> to vector<1x128xf32>
    %cst_39 = arith.constant 5.000000e-01 : f32
    %163 = vector.broadcast %cst_39 : f32 to vector<1x128xf32>
    %164 = arith.mulf %163, %162 : vector<1x128xf32>
    %cst_40 = arith.constant 5.000000e-01 : f32
    %165 = vector.broadcast %cst_40 : f32 to vector<1x128xf32>
    %166 = arith.addf %164, %165 : vector<1x128xf32>
    %167 = vector.extract_strided_slice %166 {offsets = [0, 0], sizes = [1, 32], strides = [1, 1]} : vector<1x128xf32> to vector<1x32xf32>
    %168 = vector.extract_strided_slice %166 {offsets = [0, 32], sizes = [1, 32], strides = [1, 1]} : vector<1x128xf32> to vector<1x32xf32>
    %169 = vector.extract_strided_slice %166 {offsets = [0, 96], sizes = [1, 32], strides = [1, 1]} : vector<1x128xf32> to vector<1x32xf32>
    %170 = vector.extract_strided_slice %161 {offsets = [1, 64], sizes = [1, 32], strides = [1, 1]} : vector<2x128xf32> to vector<1x32xf32>
    %171 = arith.mulf %168, %152 : vector<1x32xf32>
    %172 = arith.mulf %167, %170 : vector<1x32xf32>
    %173 = arith.addf %171, %172 : vector<1x32xf32>
    %174 = math.tanh %173 : vector<1x32xf32>
    %175 = arith.mulf %169, %174 : vector<1x32xf32>
    %176 = arith.addf %155, %175 : vector<1x32xf32>
    %cst_41 = arith.constant dense<0.000000e+00> : vector<1x128xf32>
    %177 = tpu.matmul %175, %0, %cst_41 {dimension_numbers = #tpu.dot_dimension_numbers<[1], [0], [0], [1], [0, 0, 1, 1], [], []>} : vector<1x32xf32>, vector<32x128xf32>, vector<1x128xf32> -> vector<1x128xf32>
    %178 = arith.addf %26, %177 : vector<1x128xf32>
    %cst_42 = arith.constant 5.000000e-01 : f32
    %179 = vector.broadcast %cst_42 : f32 to vector<1x128xf32>
    %180 = arith.mulf %179, %178 : vector<1x128xf32>
    %181 = tpu.concatenate %180, %178 in 0 : vector<1x128xf32>, vector<1x128xf32> -> vector<2x128xf32>
    %182 = math.tanh %181 : vector<2x128xf32>
    %183 = vector.extract_strided_slice %182 {offsets = [0, 0], sizes = [1, 128], strides = [1, 1]} : vector<2x128xf32> to vector<1x128xf32>
    %cst_43 = arith.constant 5.000000e-01 : f32
    %184 = vector.broadcast %cst_43 : f32 to vector<1x128xf32>
    %185 = arith.mulf %184, %183 : vector<1x128xf32>
    %cst_44 = arith.constant 5.000000e-01 : f32
    %186 = vector.broadcast %cst_44 : f32 to vector<1x128xf32>
    %187 = arith.addf %185, %186 : vector<1x128xf32>
    %188 = vector.extract_strided_slice %187 {offsets = [0, 0], sizes = [1, 32], strides = [1, 1]} : vector<1x128xf32> to vector<1x32xf32>
    %189 = vector.extract_strided_slice %187 {offsets = [0, 32], sizes = [1, 32], strides = [1, 1]} : vector<1x128xf32> to vector<1x32xf32>
    %190 = vector.extract_strided_slice %187 {offsets = [0, 96], sizes = [1, 32], strides = [1, 1]} : vector<1x128xf32> to vector<1x32xf32>
    %191 = vector.extract_strided_slice %182 {offsets = [1, 64], sizes = [1, 32], strides = [1, 1]} : vector<2x128xf32> to vector<1x32xf32>
    %192 = arith.mulf %189, %173 : vector<1x32xf32>
    %193 = arith.mulf %188, %191 : vector<1x32xf32>
    %194 = arith.addf %192, %193 : vector<1x32xf32>
    %195 = math.tanh %194 : vector<1x32xf32>
    %196 = arith.mulf %190, %195 : vector<1x32xf32>
    %197 = arith.addf %176, %196 : vector<1x32xf32>
    %cst_45 = arith.constant 1.250000e-01 : f32
    %198 = vector.broadcast %cst_45 : f32 to vector<1x32xf32>
    %199 = arith.mulf %197, %198 : vector<1x32xf32>
    %cst_46 = arith.constant dense<0.000000e+00> : vector<1x128xf32>
    %200 = tpu.matmul %199, %1, %cst_46 {dimension_numbers = #tpu.dot_dimension_numbers<[1], [0], [0], [1], [0, 0, 1, 1], [], []>} : vector<1x32xf32>, vector<32x128xf32>, vector<1x128xf32> -> vector<1x128xf32>
    %201 = arith.addf %200, %2 : vector<1x128xf32>
    %202 = vector.extract_strided_slice %201 {offsets = [0, 0], sizes = [1, 8], strides = [1, 1]} : vector<1x128xf32> to vector<1x8xf32>
    %cst_47 = arith.constant dense<0xFF800000> : vector<1xf32>
    %203 = vector.multi_reduction <maximumf>, %202, %cst_47 [1] : vector<1x8xf32> to vector<1xf32>
    %204 = vector.shape_cast %203 : vector<1xf32> to vector<1x1xf32>
    %205 = vector.broadcast %204 : vector<1x1xf32> to vector<1x8xf32>
    %206 = arith.subf %202, %205 : vector<1x8xf32>
    %207 = math.exp %206 : vector<1x8xf32>
    %cst_48 = arith.constant dense<0.000000e+00> : vector<1xf32>
    %208 = vector.multi_reduction <add>, %207, %cst_48 [1] : vector<1x8xf32> to vector<1xf32>
    %209 = vector.shape_cast %208 : vector<1xf32> to vector<1x1xf32>
    %210 = math.log %209 : vector<1x1xf32>
    %211 = vector.broadcast %210 : vector<1x1xf32> to vector<1x8xf32>
    %212 = arith.subf %206, %211 : vector<1x8xf32>
    %c0_49 = arith.constant 0 : index
    %c0_50 = arith.constant 0 : index
    %213 = vector.load %arg3[%c0_49, %c0_50] : memref<1x8xf32, #tpu.memory_space<vmem>>, vector<1x8xf32>
    tpu.vector_store %arg3[%c0_49, %c0_50], %212 {strides = array<i32>} : memref<1x8xf32, #tpu.memory_space<vmem>>, vector<1x8xf32>,
    return
  }
  func.func @transform_0(%arg0: i32, %arg1: memref<8xi32, #tpu.memory_space<smem>>) -> (i32, i32) {
    %c0_i32 = arith.constant 0 : i32
    %c0_i32_0 = arith.constant 0 : i32
    %c0_i32_1 = arith.constant 0 : i32
    return %c0_i32, %c0_i32_0 : i32, i32
  }
  func.func @transform_1(%arg0: i32, %arg1: memref<8xi32, #tpu.memory_space<smem>>) -> (i32, i32) {
    %c0_i32 = arith.constant 0 : i32
    %c0_i32_0 = arith.constant 0 : i32
    %c0_i32_1 = arith.constant 0 : i32
    return %c0_i32, %c0_i32_0 : i32, i32
  }
}

</mosaic_0001>

<llo_original>
// kernel: forward.1
$region0: #{forward.1}
  #allocation0 [shape = 'u32[]', space=smem, size = 0x4, offset = 0x4, fixed_abs, tag = 'smem constant byte address 0x4 - core index']
  #allocation1 [shape = 'u32[72,128]{1,0:T(1,128)}', space=vmem, size = 0x9000, scoped, tag = 'internal scratch']
  #allocation2 [shape = 's32[1]{0}', space=sflag, size = 0x4, scoped, tag = 'scoped memory for forward.1']
  #allocation3 [shape = 'u8[512]{0}', space=smem, size = 0x200, scoped, tag = 'prefetched SMEM operand 0']
  %s0 = inlined_call_operand.vmem [shape: s32[8], index: 0, kind: input, shape index: {}]
  %s1 = inlined_call_operand.hbm [shape: f32[128,128], index: 1, kind: input, shape index: {}]
  %s2 = inlined_call_operand.hbm [shape: f32[1,8], index: 2, kind: output, shape index: {}]
  %s3 = sld [smem:[#allocation0]]
  $region18: #{forward.1} parent=0
    _
  %s5 = ssub.s32 1, %s3
  %s6 = scalar_select 0, %s5, %s3
  %s8 = sshll.u32 %s0, 4
  %s9 = int_to_ptr.vmem [resolvable:$true] %s8
  %11 = dma.vmem_to_smem %s9, 16, [#allocation3], [#allocation2]
  %13 = dma.done [#allocation2], 16
  %14 = sfence
  $region1: #{forward.1} parent=0
    #allocation4 [shape = 'u8[65536]{0}', space=vmem, size = 0x10000, scoped, tag = 'input window, operand 1, single buffered']
    #allocation5 [shape = 's32[1]{0}', space=sflag, size = 0x4, scoped, tag = 'scoped memory for forward.1']
    #allocation6 [shape = 's32[1]{0}', space=sflag, size = 0x4, scoped, tag = 'scoped memory for forward.1']
    #allocation7 [shape = 'u8[512]{0}', space=vmem, size = 0x400, scoped, tag = 'output window, operand 0, single buffered']
    %15 = vsyncpa [#allocation5], 0
    %16 = vsyncpa [#allocation6], 0
    // Predicated region
    $region2: #{forward.1} parent=1 // pred_check
      _
    $region3: #{forward.1} parent=1 // pred_check_branch
      %18 = sbr.rel (0) target = $region5
    $region4: #{forward.1} parent=1 // pred_region
      %20 = vsyncadd [#allocation5], 0
      %s21 = sshll.u32 %s1, 4
      %s22 = int_to_ptr.hbm [resolvable:$true] %s21
      %s23 = sshll.u32 [#allocation4], 4
      %s24 = int_to_ptr.vmem [resolvable:$true] %s23
      %29 = dma.hbm_to_vmem [thread:$0]  %s22, 2048, %s24, [#allocation5], 128, 128, 8
    $region5: #{forward.1} parent=1 // pred_fallthru
      _
    // Predicated region
    $region6: #{forward.1} parent=1 // pred_check
      _
    $region7: #{forward.1} parent=1 // pred_check_branch
      %31 = sbr.rel (0) target = $region9
    $region8: #{forward.1} parent=1 // pred_region
      %33 = dma.done [#allocation5], 2048
    $region9: #{forward.1} parent=1 // pred_fallthru
      _
    %v34 = vld [vmem:[#allocation4 + $0x38] sm:$0xff]
    %v35 = vld [vmem:[#allocation4 + $0x40] sm:$0xff]
    %v36 = vld [vmem:[#allocation4 + $0x48] sm:$0xff]
    %v37 = vld [vmem:[#allocation4 + $0x50] sm:$0xff]
    %v38 = vld [vmem:[#allocation4 + $0x58] sm:$0xff]
    %v39 = vld [vmem:[#allocation4 + $0x60] sm:$0xff]
    %v40 = vld [vmem:[#allocation4 + $0x68] sm:$0xff]
    %v41 = vld [vmem:[#allocation4 + $0x70] sm:$0xff]
    %v42 = vld [vmem:[#allocation4 + $0x78] sm:$0x1]
    %s43 = sld [smem:[#allocation3]]
    %s44 = scalar_lea.vmem [#allocation4], %s43
    %v45 = vld [vmem:[%s44] sm:$0x1]
    %s46 = sld [smem:[#allocation3 + $0x1]]
    %s47 = scalar_lea.vmem [#allocation4], %s46
    %v48 = vld [vmem:[%s47] sm:$0x1]
    %s49 = sld [smem:[#allocation3 + $0x2]]
    %s50 = scalar_lea.vmem [#allocation4], %s49
    %v51 = vld [vmem:[%s50] sm:$0x1]
    %s52 = sld [smem:[#allocation3 + $0x3]]
    %s53 = scalar_lea.vmem [#allocation4], %s52
    %v54 = vld [vmem:[%s53] sm:$0x1]
    %s55 = sld [smem:[#allocation3 + $0x4]]
    %s56 = scalar_lea.vmem [#allocation4], %s55
    %v57 = vld [vmem:[%s56] sm:$0x1]
    %s58 = sld [smem:[#allocation3 + $0x5]]
    %s59 = scalar_lea.vmem [#allocation4], %s58
    %v60 = vld [vmem:[%s59] sm:$0x1]
    %s61 = sld [smem:[#allocation3 + $0x6]]
    %s62 = scalar_lea.vmem [#allocation4], %s61
    %v63 = vld [vmem:[%s62] sm:$0x1]
    %s64 = sld [smem:[#allocation3 + $0x7]]
    %s65 = scalar_lea.vmem [#allocation4], %s64
    %v66 = vld [vmem:[%s65] sm:$0x1]
    %vm67 = vcmask 261120
    %v69 = vsel %vm67, 0.0, 0
    %71 = vmatpush.msra.mxu0 0.0
    %72 = vmatpush.msra.mxu0 0.0
    %73 = vmatpush.msra.mxu0 0.0
    %74 = vmatpush.msra.mxu0 0.0
    %75 = vmatpush.msra.mxu0 0.0
    %76 = vmatpush.msra.mxu0 0.0
    %77 = vmatpush.msra.mxu0 0.0
    %78 = vmatpush.msra.mxu0 0.0
    %79 = vmatpush.msra.mxu0 0.0
    %80 = vmatpush.msra.mxu0 0.0
    %81 = vmatpush.msra.mxu0 0.0
    %82 = vmatpush.msra.mxu0 0.0
    %83 = vmatpush.msra.mxu0 %v37
    %84 = vmatpush.msra.mxu0 %v36
    %85 = vmatpush.msra.mxu0 %v35
    %86 = vmatpush.msra.mxu0 %v34
    %87 = vmatmul.f32.gmra.mxu0 %v69
    %v88 = vpop.f32.mrf.mxu0
    %v89 = vadd.f32 0.0, %v88
    %90 = vdwg.mxu0
    %v91 = vadd.f32 %v45, %v89
    %v92 = vmul.f32 %v91, 0.5
    %v94 = vrot.slane %v91, 7
    %vm96 = vcmask 1040384
    %v97 = vsel %vm96, %v92, %v94
    %v98 = vtanh.pop %v97
    %v99 = vmul.f32 %v98, 0.5
    %v100 = vadd.f32 %v99, 0.5
    %v101 = vmul.f32 %v100, 0.0
    %v103 = vrot.slane %v98, 1
    %104 = vrot.lane.b32.xlu0 %v103, 64
    %v105 = vpop.permute.xlu0 %104
    %v107 = vmul.f32 %v100, %v105
    %109 = vrot.lane.b32.xlu0 %v107, 32
    %v110 = vpop.permute.xlu0 %109
    %v112 = vadd.f32 %v101, %v110
    %v113 = vtanh.pop %v112
    %115 = vrot.lane.b32.xlu0 %v113, 64
    %v116 = vpop.permute.xlu0 %115
    %v118 = vmul.f32 %v100, %v116
    %v119 = vadd.f32 %v118, 0.0
    %121 = vrot.lane.b32.xlu0 %v118, 32
    %v122 = vpop.permute.xlu0 %121
    %v123 = vsel %vm67, %v122, 0
    %125 = vmatpush.msra.mxu0 0.0
    %126 = vmatpush.msra.mxu0 0.0
    %127 = vmatpush.msra.mxu0 0.0
    %128 = vmatpush.msra.mxu0 0.0
    %129 = vmatpush.msra.mxu0 0.0
    %130 = vmatpush.msra.mxu0 0.0
    %131 = vmatpush.msra.mxu0 0.0
    %132 = vmatpush.msra.mxu0 0.0
    %133 = vmatpush.msra.mxu0 0.0
    %134 = vmatpush.msra.mxu0 0.0
    %135 = vmatpush.msra.mxu0 0.0
    %136 = vmatpush.msra.mxu0 0.0
    %137 = vmatpush.msra.mxu0 %v37
    %138 = vmatpush.msra.mxu0 %v36
    %139 = vmatpush.msra.mxu0 %v35
    %140 = vmatpush.msra.mxu0 %v34
    %141 = vmatmul.f32.gmra.mxu0 %v123
    %v142 = vpop.f32.mrf.mxu0
    %v143 = vadd.f32 0.0, %v142
    %144 = vdwg.mxu0
    %v145 = vadd.f32 %v48, %v143
    %v146 = vmul.f32 %v145, 0.5
    %v148 = vrot.slane %v145, 7
    %v150 = vsel %vm96, %v146, %v148
    %v151 = vtanh.pop %v150
    %v152 = vmul.f32 %v151, 0.5
    %v153 = vadd.f32 %v152, 0.5
    %v154 = vmul.f32 %v153, %v112
    %v156 = vrot.slane %v151, 1
    %157 = vrot.lane.b32.xlu0 %v156, 64
    %v158 = vpop.permute.xlu0 %157
    %v160 = vmul.f32 %v153, %v158
    %162 = vrot.lane.b32.xlu0 %v160, 32
    %v163 = vpop.permute.xlu0 %162
    %v165 = vadd.f32 %v154, %v163
    %v166 = vtanh.pop %v165
    %168 = vrot.lane.b32.xlu0 %v166, 64
    %v169 = vpop.permute.xlu0 %168
    %v171 = vmul.f32 %v153, %v169
    %v172 = vadd.f32 %v119, %v171
    %174 = vrot.lane.b32.xlu0 %v171, 32
    %v175 = vpop.permute.xlu0 %174
    %v176 = vsel %vm67, %v175, 0
    %178 = vmatpush.msra.mxu0 0.0
    %179 = vmatpush.msra.mxu0 0.0
    %180 = vmatpush.msra.mxu0 0.0
    %181 = vmatpush.msra.mxu0 0.0
    %182 = vmatpush.msra.mxu0 0.0
    %183 = vmatpush.msra.mxu0 0.0
    %184 = vmatpush.msra.mxu0 0.0
    %185 = vmatpush.msra.mxu0 0.0
    %186 = vmatpush.msra.mxu0 0.0
    %187 = vmatpush.msra.mxu0 0.0
    %188 = vmatpush.msra.mxu0 0.0
    %189 = vmatpush.msra.mxu0 0.0
    %190 = vmatpush.msra.mxu0 %v37
    %191 = vmatpush.msra.mxu0 %v36
    %192 = vmatpush.msra.mxu0 %v35
    %193 = vmatpush.msra.mxu0 %v34
    %194 = vmatmul.f32.gmra.mxu0 %v176
    %v195 = vpop.f32.mrf.mxu0
    %v196 = vadd.f32 0.0, %v195
    %197 = vdwg.mxu0
    %v198 = vadd.f32 %v51, %v196
    %v199 = vmul.f32 %v198, 0.5
    %v201 = vrot.slane %v198, 7
    %v203 = vsel %vm96, %v199, %v201
    %v204 = vtanh.pop %v203
    %v205 = vmul.f32 %v204, 0.5
    %v206 = vadd.f32 %v205, 0.5
    %v207 = vmul.f32 %v206, %v165
    %v209 = vrot.slane %v204, 1
    %210 = vrot.lane.b32.xlu0 %v209, 64
    %v211 = vpop.permute.xlu0 %210
    %v213 = vmul.f32 %v206, %v211
    %215 = vrot.lane.b32.xlu0 %v213, 32
    %v216 = vpop.permute.xlu0 %215
    %v218 = vadd.f32 %v207, %v216
    %v219 = vtanh.pop %v218
    %221 = vrot.lane.b32.xlu0 %v219, 64
    %v222 = vpop.permute.xlu0 %221
    %v224 = vmul.f32 %v206, %v222
    %v225 = vadd.f32 %v172, %v224
    %227 = vrot.lane.b32.xlu0 %v224, 32
    %v228 = vpop.permute.xlu0 %227
    %v229 = vsel %vm67, %v228, 0
    %231 = vmatpush.msra.mxu0 0.0
    %232 = vmatpush.msra.mxu0 0.0
    %233 = vmatpush.msra.mxu0 0.0
    %234 = vmatpush.msra.mxu0 0.0
    %235 = vmatpush.msra.mxu0 0.0
    %236 = vmatpush.msra.mxu0 0.0
    %237 = vmatpush.msra.mxu0 0.0
    %238 = vmatpush.msra.mxu0 0.0
    %239 = vmatpush.msra.mxu0 0.0
    %240 = vmatpush.msra.mxu0 0.0
    %241 = vmatpush.msra.mxu0 0.0
    %242 = vmatpush.msra.mxu0 0.0
    %243 = vmatpush.msra.mxu0 %v37
    %244 = vmatpush.msra.mxu0 %v36
    %245 = vmatpush.msra.mxu0 %v35
    %246 = vmatpush.msra.mxu0 %v34
    %247 = vmatmul.f32.gmra.mxu0 %v229
    %v248 = vpop.f32.mrf.mxu0
    %v249 = vadd.f32 0.0, %v248
    %250 = vdwg.mxu0
    %v251 = vadd.f32 %v54, %v249
    %v252 = vmul.f32 %v251, 0.5
    %v254 = vrot.slane %v251, 7
    %v256 = vsel %vm96, %v252, %v254
    %v257 = vtanh.pop %v256
    %v258 = vmul.f32 %v257, 0.5
    %v259 = vadd.f32 %v258, 0.5
    %v260 = vmul.f32 %v259, %v218
    %v262 = vrot.slane %v257, 1
    %263 = vrot.lane.b32.xlu0 %v262, 64
    %v264 = vpop.permute.xlu0 %263
    %v266 = vmul.f32 %v259, %v264
    %268 = vrot.lane.b32.xlu0 %v266, 32
    %v269 = vpop.permute.xlu0 %268
    %v271 = vadd.f32 %v260, %v269
    %v272 = vtanh.pop %v271
    %274 = vrot.lane.b32.xlu0 %v272, 64
    %v275 = vpop.permute.xlu0 %274
    %v277 = vmul.f32 %v259, %v275
    %v278 = vadd.f32 %v225, %v277
    %280 = vrot.lane.b32.xlu0 %v277, 32
    %v281 = vpop.permute.xlu0 %280
    %v282 = vsel %vm67, %v281, 0
    %284 = vmatpush.msra.mxu0 0.0
    %285 = vmatpush.msra.mxu0 0.0
    %286 = vmatpush.msra.mxu0 0.0
    %287 = vmatpush.msra.mxu0 0.0
    %288 = vmatpush.msra.mxu0 0.0
    %289 = vmatpush.msra.mxu0 0.0
    %290 = vmatpush.msra.mxu0 0.0
    %291 = vmatpush.msra.mxu0 0.0
    %292 = vmatpush.msra.mxu0 0.0
    %293 = vmatpush.msra.mxu0 0.0
    %294 = vmatpush.msra.mxu0 0.0
    %295 = vmatpush.msra.mxu0 0.0
    %296 = vmatpush.msra.mxu0 %v37
    %297 = vmatpush.msra.mxu0 %v36
    %298 = vmatpush.msra.mxu0 %v35
    %299 = vmatpush.msra.mxu0 %v34
    %300 = vmatmul.f32.gmra.mxu0 %v282
    %v301 = vpop.f32.mrf.mxu0
    %v302 = vadd.f32 0.0, %v301
    %303 = vdwg.mxu0
    %v304 = vadd.f32 %v57, %v302
    %v305 = vmul.f32 %v304, 0.5
    %v307 = vrot.slane %v304, 7
    %v309 = vsel %vm96, %v305, %v307
    %v310 = vtanh.pop %v309
    %v311 = vmul.f32 %v310, 0.5
    %v312 = vadd.f32 %v311, 0.5
    %v313 = vmul.f32 %v312, %v271
    %v315 = vrot.slane %v310, 1
    %316 = vrot.lane.b32.xlu0 %v315, 64
    %v317 = vpop.permute.xlu0 %316
    %v319 = vmul.f32 %v312, %v317
    %321 = vrot.lane.b32.xlu0 %v319, 32
    %v322 = vpop.permute.xlu0 %321
    %v324 = vadd.f32 %v313, %v322
    %v325 = vtanh.pop %v324
    %327 = vrot.lane.b32.xlu0 %v325, 64
    %v328 = vpop.permute.xlu0 %327
    %v330 = vmul.f32 %v312, %v328
    %v331 = vadd.f32 %v278, %v330
    %333 = vrot.lane.b32.xlu0 %v330, 32
    %v334 = vpop.permute.xlu0 %333
    %v335 = vsel %vm67, %v334, 0
    %337 = vmatpush.msra.mxu0 0.0
    %338 = vmatpush.msra.mxu0 0.0
    %339 = vmatpush.msra.mxu0 0.0
    %340 = vmatpush.msra.mxu0 0.0
    %341 = vmatpush.msra.mxu0 0.0
    %342 = vmatpush.msra.mxu0 0.0
    %343 = vmatpush.msra.mxu0 0.0
    %344 = vmatpush.msra.mxu0 0.0
    %345 = vmatpush.msra.mxu0 0.0
    %346 = vmatpush.msra.mxu0 0.0
    %347 = vmatpush.msra.mxu0 0.0
    %348 = vmatpush.msra.mxu0 0.0
    %349 = vmatpush.msra.mxu0 %v37
    %350 = vmatpush.msra.mxu0 %v36
    %351 = vmatpush.msra.mxu0 %v35
    %352 = vmatpush.msra.mxu0 %v34
    %353 = vmatmul.f32.gmra.mxu0 %v335
    %v354 = vpop.f32.mrf.mxu0
    %v355 = vadd.f32 0.0, %v354
    %356 = vdwg.mxu0
    %v357 = vadd.f32 %v60, %v355
    %v358 = vmul.f32 %v357, 0.5
    %v360 = vrot.slane %v357, 7
    %v362 = vsel %vm96, %v358, %v360
    %v363 = vtanh.pop %v362
    %v364 = vmul.f32 %v363, 0.5
    %v365 = vadd.f32 %v364, 0.5
    %v366 = vmul.f32 %v365, %v324
    %v368 = vrot.slane %v363, 1
    %369 = vrot.lane.b32.xlu0 %v368, 64
    %v370 = vpop.permute.xlu0 %369
    %v372 = vmul.f32 %v365, %v370
    %374 = vrot.lane.b32.xlu0 %v372, 32
    %v375 = vpop.permute.xlu0 %374
    %v377 = vadd.f32 %v366, %v375
    %v378 = vtanh.pop %v377
    %380 = vrot.lane.b32.xlu0 %v378, 64
    %v381 = vpop.permute.xlu0 %380
    %v383 = vmul.f32 %v365, %v381
    %v384 = vadd.f32 %v331, %v383
    %386 = vrot.lane.b32.xlu0 %v383, 32
    %v387 = vpop.permute.xlu0 %386
    %v388 = vsel %vm67, %v387, 0
    %390 = vmatpush.msra.mxu0 0.0
    %391 = vmatpush.msra.mxu0 0.0
    %392 = vmatpush.msra.mxu0 0.0
    %393 = vmatpush.msra.mxu0 0.0
    %394 = vmatpush.msra.mxu0 0.0
    %395 = vmatpush.msra.mxu0 0.0
    %396 = vmatpush.msra.mxu0 0.0
    %397 = vmatpush.msra.mxu0 0.0
    %398 = vmatpush.msra.mxu0 0.0
    %399 = vmatpush.msra.mxu0 0.0
    %400 = vmatpush.msra.mxu0 0.0
    %401 = vmatpush.msra.mxu0 0.0
    %402 = vmatpush.msra.mxu0 %v37
    %403 = vmatpush.msra.mxu0 %v36
    %404 = vmatpush.msra.mxu0 %v35
    %405 = vmatpush.msra.mxu0 %v34
    %406 = vmatmul.f32.gmra.mxu0 %v388
    %v407 = vpop.f32.mrf.mxu0
    %v408 = vadd.f32 0.0, %v407
    %409 = vdwg.mxu0
    %v410 = vadd.f32 %v63, %v408
    %v411 = vmul.f32 %v410, 0.5
    %v413 = vrot.slane %v410, 7
    %v415 = vsel %vm96, %v411, %v413
    %v416 = vtanh.pop %v415
    %v417 = vmul.f32 %v416, 0.5
    %v418 = vadd.f32 %v417, 0.5
    %v419 = vmul.f32 %v418, %v377
    %v421 = vrot.slane %v416, 1
    %422 = vrot.lane.b32.xlu0 %v421, 64
    %v423 = vpop.permute.xlu0 %422
    %v425 = vmul.f32 %v418, %v423
    %427 = vrot.lane.b32.xlu0 %v425, 32
    %v428 = vpop.permute.xlu0 %427
    %v430 = vadd.f32 %v419, %v428
    %v431 = vtanh.pop %v430
    %433 = vrot.lane.b32.xlu0 %v431, 64
    %v434 = vpop.permute.xlu0 %433
    %v436 = vmul.f32 %v418, %v434
    %v437 = vadd.f32 %v384, %v436
    %439 = vrot.lane.b32.xlu0 %v436, 32
    %v440 = vpop.permute.xlu0 %439
    %v441 = vsel %vm67, %v440, 0
    %443 = vmatpush.msra.mxu0 0.0
    %444 = vmatpush.msra.mxu0 0.0
    %445 = vmatpush.msra.mxu0 0.0
    %446 = vmatpush.msra.mxu0 0.0
    %447 = vmatpush.msra.mxu0 0.0
    %448 = vmatpush.msra.mxu0 0.0
    %449 = vmatpush.msra.mxu0 0.0
    %450 = vmatpush.msra.mxu0 0.0
    %451 = vmatpush.msra.mxu0 0.0
    %452 = vmatpush.msra.mxu0 0.0
    %453 = vmatpush.msra.mxu0 0.0
    %454 = vmatpush.msra.mxu0 0.0
    %455 = vmatpush.msra.mxu0 %v37
    %456 = vmatpush.msra.mxu0 %v36
    %457 = vmatpush.msra.mxu0 %v35
    %458 = vmatpush.msra.mxu0 %v34
    %459 = vmatmul.f32.gmra.mxu0 %v441
    %v460 = vpop.f32.mrf.mxu0
    %v461 = vadd.f32 0.0, %v460
    %462 = vdwg.mxu0
    %v463 = vadd.f32 %v66, %v461
    %v464 = vmul.f32 %v463, 0.5
    %v466 = vrot.slane %v463, 7
    %v468 = vsel %vm96, %v464, %v466
    %v469 = vtanh.pop %v468
    %v470 = vmul.f32 %v469, 0.5
    %v471 = vadd.f32 %v470, 0.5
    %v472 = vmul.f32 %v471, %v430
    %v474 = vrot.slane %v469, 1
    %475 = vrot.lane.b32.xlu0 %v474, 64
    %v476 = vpop.permute.xlu0 %475
    %v478 = vmul.f32 %v471, %v476
    %480 = vrot.lane.b32.xlu0 %v478, 32
    %v481 = vpop.permute.xlu0 %480
    %v483 = vadd.f32 %v472, %v481
    %v484 = vtanh.pop %v483
    %486 = vrot.lane.b32.xlu0 %v484, 64
    %v487 = vpop.permute.xlu0 %486
    %v489 = vmul.f32 %v471, %v487
    %v490 = vadd.f32 %v437, %v489
    %v491 = vmul.f32 %v490, 0.125
    %493 = vrot.lane.b32.xlu0 %v491, 32
    %v494 = vpop.permute.xlu0 %493
    %v495 = vsel %vm67, %v494, 0
    %497 = vmatpush.msra.mxu0 0.0
    %498 = vmatpush.msra.mxu0 0.0
    %499 = vmatpush.msra.mxu0 0.0
    %500 = vmatpush.msra.mxu0 0.0
    %501 = vmatpush.msra.mxu0 0.0
    %502 = vmatpush.msra.mxu0 0.0
    %503 = vmatpush.msra.mxu0 0.0
    %504 = vmatpush.msra.mxu0 0.0
    %505 = vmatpush.msra.mxu0 0.0
    %506 = vmatpush.msra.mxu0 0.0
    %507 = vmatpush.msra.mxu0 0.0
    %508 = vmatpush.msra.mxu0 0.0
    %509 = vmatpush.msra.mxu0 %v41
    %510 = vmatpush.msra.mxu0 %v40
    %511 = vmatpush.msra.mxu0 %v39
    %512 = vmatpush.msra.mxu0 %v38
    %513 = vmatmul.f32.gmra.mxu0 %v495
    %v514 = vpop.f32.mrf.mxu0
    %v515 = vadd.f32 %v42, %v514
    %516 = vdwg.mxu0
    %vm517 = vcmask 57344
    %v518 = vsel %vm517, %v515, -inf
    %519 = vmax.xlane.f32.xlu0 %v518
    %v520 = vpop.xlane.xlu0 %519
    %v521 = vsub.f32 %v515, %v520
    %v522 = vmul.f32 %v521, 1.442695
    %v523 = vpow.pop %v522
    %v524 = vsel %vm517, %v523, 0.0
    %525 = vadd.xlane.f32.xlu0 %v524
    %v526 = vpop.xlane.xlu0 %525
    %v527 = vlog2.pop %v526
    %v528 = vmul.f32 %v527, 0.6931472
    %v529 = vsub.f32 %v521, %v528
    %530 = vst.msk [vmem:[#allocation7] sm:$0x1] %vm517, %v529
    // Predicated region
    $region10: #{forward.1} parent=1 // pred_check
      _
    $region11: #{forward.1} parent=1 // pred_check_branch
      %532 = sbr.rel (0) target = $region13
    $region12: #{forward.1} parent=1 // pred_region
      %534 = vsyncadd [#allocation6], 0
      %s536 = sshll.u32 [#allocation7], 4
      %s537 = int_to_ptr.vmem [resolvable:$true] %s536
      %s538 = sshll.u32 %s2, 4
      %s539 = int_to_ptr.hbm [resolvable:$true] %s538
      %541 = dma.vmem_to_hbm [thread:$0]  %s537, 16, %s539, [#allocation6]
    $region13: #{forward.1} parent=1 // pred_fallthru
      _
    // Predicated region
    $region14: #{forward.1} parent=1 // pred_check
      _
    $region15: #{forward.1} parent=1 // pred_check_branch
      %543 = sbr.rel (0) target = $region17
    $region16: #{forward.1} parent=1 // pred_region
      %545 = dma.done [#allocation6], 16
    $region17: #{forward.1} parent=1 // pred_fallthru
      _
    %546 = vsyncpa [#allocation5], 1
    %547 = vsyncpa [#allocation6], 1

</llo_original>
